<compile_context>
chip_gen: v7x
topology: tpu7x:2x2x1
jax: 0.10.0
libtpu: 0.0.40
codegen_flags: <defaults>
</compile_context>

<pallas_src>
import functools

import jax
import jax.numpy as jnp
from jax import lax
from jax.experimental import pallas as pl
from jax.experimental.pallas import tpu as pltpu

_LANE = 128
_MAX_BLOCK_ROWS = 2048  # (2048,128) f32 = 1 MiB per input block


def _smooth_l1_partial_kernel(pred_ref, gt_ref, out_ref, *, gamma, block_rows,
                              rows_valid, need_mask):
    # Upcast in-kernel (no-op for f32 inputs; avoids a host-side HBM cast pass for bf16).
    p = pred_ref[...].astype(jnp.float32)
    g = gt_ref[...].astype(jnp.float32)

    diff = jnp.abs(g - p)
    loss = jnp.where(diff <= gamma, 0.5 * gamma * diff * diff, diff - 0.5 / gamma)

    if need_mask:
        # Last block over-runs the (rows, 128) view; OOB rows hold unspecified data.
        row_idx = pl.program_id(0) * block_rows + lax.broadcasted_iota(
            jnp.int32, (block_rows, _LANE), 0)
        loss = jnp.where(row_idx < rows_valid, loss, jnp.float32(0.0))

    # (block_rows,128) -> (block_rows//8, 8, 128): tile-boundary-preserving reshape,
    # then reduce over the leading (vreg) axis -> pure VPU adds, no per-step XLU reduce.
    out_ref[...] = loss.reshape(block_rows // 8, 8, _LANE).sum(axis=0)


def smooth_l1_loss(pred, gt, gamma=9.0):
    assert pred.shape == gt.shape
    n = int(pred.size)

    pred_f = pred.reshape(-1)
    gt_f = gt.reshape(-1)

    # Only pad the tail (<=127 elems) if n is not a multiple of 128; zero pads
    # contribute exactly 0 to the loss sum. For the common aligned case this is
    # a free bitcast-style reshape (no extra HBM pass).
    rem = n % _LANE
    if rem:
        pad = _LANE - rem
        pred_f = jnp.pad(pred_f, (0, pad))
        gt_f = jnp.pad(gt_f, (0, pad))

    pred2 = pred_f.reshape(-1, _LANE)
    gt2 = gt_f.reshape(-1, _LANE)
    rows = pred2.shape[0]

    # Sublane packing: 8 rows/vreg for 4-byte dtypes, 16 for 2-byte (bf16/fp16).
    sub = 8 if pred2.dtype.itemsize >= 4 else 16
    block_rows = min(_MAX_BLOCK_ROWS, ((rows + sub - 1) // sub) * sub)
    num_blocks = pl.cdiv(rows, block_rows)
    need_mask = (rows % block_rows) != 0

    kernel = functools.partial(
        _smooth_l1_partial_kernel,
        gamma=float(gamma),
        block_rows=block_rows,
        rows_valid=rows,
        need_mask=need_mask,
    )

    bytes_in = 2 * n * pred2.dtype.itemsize
    bytes_out = num_blocks * 8 * _LANE * 4

    partials = pl.pallas_call(
        kernel,
        out_shape=jax.ShapeDtypeStruct((num_blocks * 8, _LANE), jnp.float32),
        grid_spec=pltpu.PrefetchScalarGridSpec(
            num_scalar_prefetch=0,
            grid=(num_blocks,),
            in_specs=[
                pl.BlockSpec((block_rows, _LANE), lambda i: (i, 0)),
                pl.BlockSpec((block_rows, _LANE), lambda i: (i, 0)),
            ],
            out_specs=pl.BlockSpec((8, _LANE), lambda i: (i, 0)),
        ),
        compiler_params=pltpu.CompilerParams(
            dimension_semantics=("parallel",),
        ),
        cost_estimate=pl.CostEstimate(
            flops=7 * n,
            transcendentals=0,
            bytes_accessed=bytes_in + bytes_out,
        ),
    )(pred2, gt2)

    # Tiny epilogue: one cross-lane reduce over num_blocks*1024 f32 partials + divide.
    total = jnp.sum(partials, dtype=jnp.float32)
    return (total / jnp.float32(n)).reshape(-1)  # shape (1,)


def smooth_l1_loss_ref(pred, gt, gamma=9.0):
    diff = jnp.abs(gt - pred)
    loss = jnp.where(diff <= gamma, 0.5 * gamma * diff * diff, diff - 0.5 / gamma)
    return jnp.mean(loss).reshape(-1)


if __name__ == "__main__":
    key = jax.random.PRNGKey(0)
    k1, k2 = jax.random.split(key)
    # Small NCHW-like shapes consistent with an auto-encoder reconstruction loss.
    pred = jax.random.normal(k1, (2, 4, 16, 16), dtype=jnp.float32) * 5.0
    gt = jax.random.normal(k2, (2, 4, 16, 16), dtype=jnp.float32) * 5.0

    out = smooth_l1_loss(pred, gt, gamma=9.0)
    out = jax.block_until_ready(out)

    ref = smooth_l1_loss_ref(pred, gt, gamma=9.0)
    assert out.shape == (1,), out.shape
    assert jnp.allclose(out, ref, rtol=1e-5, atol=1e-5), (out, ref)
    print("KERNEL_OK")
</pallas_src>

<mosaic_0001>
module attributes {stable_mosaic.version = 11 : i64} {
  func.func @_smooth_l1_partial_kernel(%arg0: i32, %arg1: memref<16x128xf32, #tpu.memory_space<vmem>>, %arg2: memref<16x128xf32, #tpu.memory_space<vmem>>, %arg3: memref<8x128xf32, #tpu.memory_space<vmem>>) attributes {dimension_semantics = [#tpu.dimension_semantics<parallel>], iteration_bounds = array<i64: 1>, scalar_prefetch = 0 : i64, scratch_operands = 0 : i64, tpu.core_type = #tpu.core_type<tc>, window_params = [{transform_indices = @transform_0, window_bounds = array<i64: 16, 128>}, {transform_indices = @transform_1, window_bounds = array<i64: 16, 128>}, {transform_indices = @transform_2, window_bounds = array<i64: 8, 128>}]} {
    %c0 = arith.constant 0 : index
    %c0_0 = arith.constant 0 : index
    %0 = vector.load %arg1[%c0, %c0_0] : memref<16x128xf32, #tpu.memory_space<vmem>>, vector<16x128xf32>
    %c0_1 = arith.constant 0 : index
    %c0_2 = arith.constant 0 : index
    %1 = vector.load %arg2[%c0_1, %c0_2] : memref<16x128xf32, #tpu.memory_space<vmem>>, vector<16x128xf32>
    %2 = arith.subf %1, %0 : vector<16x128xf32>
    %3 = math.absf %2 : vector<16x128xf32>
    %cst = arith.constant 9.000000e+00 : f32
    %4 = vector.broadcast %cst : f32 to vector<16x128xf32>
    %5 = arith.cmpf ole, %3, %4 : vector<16x128xf32>
    %cst_3 = arith.constant 4.500000e+00 : f32
    %6 = vector.broadcast %cst_3 : f32 to vector<16x128xf32>
    %7 = arith.mulf %6, %3 : vector<16x128xf32>
    %8 = arith.mulf %7, %3 : vector<16x128xf32>
    %cst_4 = arith.constant 0.055555556 : f32
    %9 = vector.broadcast %cst_4 : f32 to vector<16x128xf32>
    %10 = arith.subf %3, %9 : vector<16x128xf32>
    %11 = arith.select %5, %8, %10 : vector<16x128xi1>, vector<16x128xf32>
    %12 = vector.shape_cast %11 : vector<16x128xf32> to vector<2x8x128xf32>
    %cst_5 = arith.constant dense<0.000000e+00> : vector<8x128xf32>
    %13 = vector.multi_reduction <add>, %12, %cst_5 [0] : vector<2x8x128xf32> to vector<8x128xf32>
    %c0_6 = arith.constant 0 : index
    %c0_7 = arith.constant 0 : index
    %14 = vector.load %arg3[%c0_6, %c0_7] : memref<8x128xf32, #tpu.memory_space<vmem>>, vector<8x128xf32>
    tpu.vector_store %arg3[%c0_6, %c0_7], %13 {strides = array<i32>} : memref<8x128xf32, #tpu.memory_space<vmem>>, vector<8x128xf32>,
    return
  }
  func.func @transform_0(%arg0: i32) -> (i32, i32) {
    %c0_i32 = arith.constant 0 : i32
    %c0_i32_0 = arith.constant 0 : i32
    return %arg0, %c0_i32 : i32, i32
  }
  func.func @transform_1(%arg0: i32) -> (i32, i32) {
    %c0_i32 = arith.constant 0 : i32
    %c0_i32_0 = arith.constant 0 : i32
    return %arg0, %c0_i32 : i32, i32
  }
  func.func @transform_2(%arg0: i32) -> (i32, i32) {
    %c0_i32 = arith.constant 0 : i32
    %c0_i32_0 = arith.constant 0 : i32
    return %arg0, %c0_i32 : i32, i32
  }
}

</mosaic_0001>

<llo_original>
// kernel: tpu_custom_call.1
$region0: #{tpu_custom_call.1}
  #allocation0 [shape = 'u32[]', space=smem, size = 0x4, offset = 0x4, fixed_abs, tag = 'smem constant byte address 0x4 - core index']
  #allocation1 [shape = 'u32[144,128]{1,0:T(1,128)}', space=vmem, size = 0x12000, scoped, tag = 'internal scratch']
  %s0 = inlined_call_operand.hbm [shape: f32[16,128], index: 0, kind: input, shape index: {}]
  %s1 = inlined_call_operand.hbm [shape: f32[16,128], index: 1, kind: input, shape index: {}]
  %s2 = inlined_call_operand.hbm [shape: f32[8,128], index: 2, kind: output, shape index: {}]
  %s3 = sld [smem:[#allocation0]]
  $region26: #{tpu_custom_call.1} parent=0
    _
  %s5 = ssub.s32 1, %s3
  %s6 = scalar_select 0, %s5, %s3
  $region1: #{tpu_custom_call.1} parent=0
    #allocation2 [shape = 'u8[8192]{0}', space=vmem, size = 0x2000, scoped, tag = 'input window, operand 0, single buffered']
    #allocation3 [shape = 's32[1]{0}', space=sflag, size = 0x4, scoped, tag = 'scoped memory for tpu_custom_call.1']
    #allocation4 [shape = 's32[1]{0}', space=sflag, size = 0x4, scoped, tag = 'scoped memory for tpu_custom_call.1']
    #allocation5 [shape = 'u8[8192]{0}', space=vmem, size = 0x2000, scoped, tag = 'input window, operand 1, single buffered']
    #allocation6 [shape = 's32[1]{0}', space=sflag, size = 0x4, scoped, tag = 'scoped memory for tpu_custom_call.1']
    #allocation7 [shape = 'u8[4096]{0}', space=vmem, size = 0x1000, scoped, tag = 'output window, operand 0, single buffered']
    %7 = vsyncpa [#allocation3], 0
    %8 = vsyncpa [#allocation6], 0
    %9 = vsyncpa [#allocation4], 0
    // Predicated region
    $region2: #{tpu_custom_call.1} parent=1 // pred_check
      _
    $region3: #{tpu_custom_call.1} parent=1 // pred_check_branch
      %11 = sbr.rel (0) target = $region5
    $region4: #{tpu_custom_call.1} parent=1 // pred_region
      %s13 = ssub.s32 256, 256
      %14 = vsyncadd [#allocation3], %s13
      %s15 = sshll.u32 [#allocation2], 4
      %s16 = int_to_ptr.vmem [resolvable:$true] %s15
      %21 = dma.hbm_to_vmem [thread:$0]  %s0, 256, %s16, [#allocation3], 128, 128, 8
    $region5: #{tpu_custom_call.1} parent=1 // pred_fallthru
      _
    // Predicated region
    $region6: #{tpu_custom_call.1} parent=1 // pred_check
      _
    $region7: #{tpu_custom_call.1} parent=1 // pred_check_branch
      %23 = sbr.rel (0) target = $region9
    $region8: #{tpu_custom_call.1} parent=1 // pred_region
      %s25 = ssub.s32 256, 256
      %26 = vsyncadd [#allocation6], %s25
      %s27 = sshll.u32 [#allocation5], 4
      %s28 = int_to_ptr.vmem [resolvable:$true] %s27
      %33 = dma.hbm_to_vmem [thread:$0]  %s1, 256, %s28, [#allocation6], 128, 128, 8
    $region9: #{tpu_custom_call.1} parent=1 // pred_fallthru
      _
    // Predicated region
    $region10: #{tpu_custom_call.1} parent=1 // pred_check
      _
    $region11: #{tpu_custom_call.1} parent=1 // pred_check_branch
      %35 = sbr.rel (0) target = $region13
    $region12: #{tpu_custom_call.1} parent=1 // pred_region
      %36 = dma.done [#allocation3], 256
    $region13: #{tpu_custom_call.1} parent=1 // pred_fallthru
      _
    // Predicated region
    $region14: #{tpu_custom_call.1} parent=1 // pred_check
      _
    $region15: #{tpu_custom_call.1} parent=1 // pred_check_branch
      %38 = sbr.rel (0) target = $region17
    $region16: #{tpu_custom_call.1} parent=1 // pred_region
      %39 = dma.done [#allocation6], 256
    $region17: #{tpu_custom_call.1} parent=1 // pred_fallthru
      _
    %v40 = vld [vmem:[#allocation2] sm:$0xff]
    %v41 = vld [vmem:[#allocation2 + $0x8] sm:$0xff]
    %v42 = vld [vmem:[#allocation5] sm:$0xff]
    %v43 = vld [vmem:[#allocation5 + $0x8] sm:$0xff]
    %v44 = vsub.f32 %v42, %v40
    %v45 = vsub.f32 %v43, %v41
    %v46 = vand.u32 2147483647, %v44
    %v47 = vand.u32 2147483647, %v45
    %vm48 = vcmp.le.f32.partialorder %v46, 9.0
    %vm49 = vcmp.le.f32.partialorder %v47, 9.0
    %v50 = vmul.f32 %v46, 4.5
    %v51 = vmul.f32 %v47, 4.5
    %v52 = vmul.f32 %v50, %v46
    %v53 = vmul.f32 %v51, %v47
    %v54 = vsub.f32 %v46, 0.055555556
    %v55 = vsub.f32 %v47, 0.055555556
    %v56 = vsel %vm48, %v52, %v54
    %v57 = vsel %vm49, %v53, %v55
    %v58 = vadd.f32 %v56, %v57
    %59 = vst [vmem:[#allocation7] sm:$0xff] %v58
    // Predicated region
    $region18: #{tpu_custom_call.1} parent=1 // pred_check
      _
    $region19: #{tpu_custom_call.1} parent=1 // pred_check_branch
      %61 = sbr.rel (0) target = $region21
    $region20: #{tpu_custom_call.1} parent=1 // pred_region
      %s63 = ssub.s32 128, 128
      %64 = vsyncadd [#allocation4], %s63
      %s66 = sshll.u32 [#allocation7], 4
      %s67 = int_to_ptr.vmem [resolvable:$true] %s66
      %69 = dma.vmem_to_hbm [thread:$0]  %s67, 128, %s2, [#allocation4]
    $region21: #{tpu_custom_call.1} parent=1 // pred_fallthru
      _
    // Predicated region
    $region22: #{tpu_custom_call.1} parent=1 // pred_check
      _
    $region23: #{tpu_custom_call.1} parent=1 // pred_check_branch
      %71 = sbr.rel (0) target = $region25
    $region24: #{tpu_custom_call.1} parent=1 // pred_region
      %72 = dma.done [#allocation4], 128
    $region25: #{tpu_custom_call.1} parent=1 // pred_fallthru
      _
    %73 = vsyncpa [#allocation3], 1
    %74 = vsyncpa [#allocation6], 1
    %75 = vsyncpa [#allocation4], 1

</llo_original>
